<compile_context>
chip_gen: v7x
topology: tpu7x:2x2x1
jax: 0.10.0
libtpu: 0.0.40
codegen_flags: <defaults>
</compile_context>

<pallas_src>
import jax
import jax.numpy as jnp
import numpy as np
from jax.experimental import pallas as pl
from jax.experimental.pallas import tpu as pltpu

_TARGET_BLOCK_BYTES = 6 * 1024 * 1024   # ~6 MiB of x streamed per grid step
_VMEM_LIMIT_BYTES = 48 * 1024 * 1024    # > v5e/v6e scoped defaults, < v7x 64 MiB physical
_BN_EPS = 1e-5


def dtcf_kernel(x_ref, wb_ref, wt_ref, wf_ref, bias_ref, pool_ref,
                exp_t_ref, exp_f_ref, o_ref, gap_scr, at_scr, af_scr):
    """x_ref / o_ref: (bb, C, F*T) streamed blocks; all other operands are tiny."""
    bb, C, FT = x_ref.shape
    T = exp_t_ref.shape[0]
    Fd = exp_f_ref.shape[0]

    # Native-dtype view of the whole block with batches stacked along the sublane axis;
    # FT stays the lane axis (layout-free merge when C is a multiple of 8).
    xf = x_ref[...].reshape(bb * C, FT)

    # (1) pooled time / freq statistics for the whole block in ONE batched matmul:
    #     gap[(b,c), :T] = mean_f x[b,c,f,t],  gap[(b,c), T:] = mean_t x[b,c,f,t]
    gap_scr[...] = jnp.dot(
        xf, pool_ref[...], preferred_element_type=jnp.float32).reshape(bb, C, T + Fd)

    wb = wb_ref[...]      # (Cr, C)  bottleneck 1x1 conv with BN scale folded in
    wt = wt_ref[...]      # (C, Cr)  time-attention head
    wf = wf_ref[...]      # (C, Cr)  freq-attention head
    bias = bias_ref[...]  # (Cr, 1)  folded BN shift

    # (2) tiny per-batch channel mixing (bottleneck + BN + ReLU + heads + sigmoid).
    #     Operands are (C, T+F)-sized, negligible next to the stream; a pl.loop keeps
    #     live ranges bounded for large bb (no static Python unroll).
    @pl.loop(0, bb)
    def _(b):
        g = gap_scr[b]                                                       # (C, T+F)
        z = jnp.maximum(
            jnp.dot(wb, g, preferred_element_type=jnp.float32) + bias, 0.0)  # (Cr, T+F)
        at_scr[b] = jax.nn.sigmoid(
            jnp.dot(wt, z[:, :T], preferred_element_type=jnp.float32))       # (C, T)
        af_scr[b] = jax.nn.sigmoid(
            jnp.dot(wf, z[:, T:], preferred_element_type=jnp.float32))       # (C, F)

    # (3) fused gate on the flat lane axis, batched over the whole block:
    #     gate[(b,c), f*T+t] = at[b,c,t] * af[b,c,f]
    at = at_scr[...].reshape(bb * C, T).astype(x_ref.dtype)
    af = af_scr[...].reshape(bb * C, Fd).astype(x_ref.dtype)
    gate = (jnp.dot(at, exp_t_ref[...], preferred_element_type=jnp.float32) *
            jnp.dot(af, exp_f_ref[...], preferred_element_type=jnp.float32))  # (bb*C, FT)

    # (4) apply the gate in the input dtype (no f32 upcast of the big tile).
    o_ref[...] = (xf * gate.astype(o_ref.dtype)).reshape(bb, C, FT)


@jax.jit
def dtcf_attention(x, w_bottleneck, w_time, w_freq, gamma, beta, r_mean, r_var):
    B, C, F, T = x.shape
    Cr = w_bottleneck.shape[0]
    FT = F * T
    P = T + F
    dt = x.dtype
    itemsize = jnp.dtype(dt).itemsize

    # ---- fold inference-mode BatchNorm into the bottleneck weight + bias ----
    scale = gamma / jnp.sqrt(r_var + _BN_EPS)
    shift = beta - r_mean * scale
    wb_scaled = (scale[:, None] * w_bottleneck).astype(jnp.float32)          # (Cr, C)
    bias = shift.reshape(Cr, 1).astype(jnp.float32)                          # (Cr, 1)

    # ---- tiny channel-independent pooling / lane-broadcast helpers ----
    # Carried in the input dtype so the big streamed matmuls run at native precision
    # (exp_* are 0/1 matrices, exact in bf16; pool holds 1/F, 1/T).
    eye_t = jnp.eye(T, dtype=jnp.float32)
    eye_f = jnp.eye(F, dtype=jnp.float32)
    pool = jnp.concatenate(
        [jnp.kron(jnp.ones((F, 1), jnp.float32), eye_t) / F,    # freq-avg pool  (FT, T)
         jnp.kron(eye_f, jnp.ones((T, 1), jnp.float32)) / T],   # time-avg pool  (FT, F)
        axis=1).astype(dt)                                       # (FT, T+F)
    exp_t = jnp.kron(jnp.ones((1, F), jnp.float32), eye_t).astype(dt)        # (T, FT)
    exp_f = jnp.kron(eye_f, jnp.ones((1, T), jnp.float32)).astype(dt)        # (F, FT)

    # ---- batch-block sizing: big blocks, inside VMEM, >= 2 grid steps when possible ----
    per_batch_bytes = max(C * FT * itemsize, 1)
    bb = max(1, _TARGET_BLOCK_BYTES // per_batch_bytes)
    # double-buffered in + out blocks (~4x block) plus f32 scratch must fit scoped VMEM
    scratch_per_batch = 4 * C * 2 * P
    bb_vmem = max(1, (_VMEM_LIMIT_BYTES * 3 // 4) //
                  (4 * per_batch_bytes + scratch_per_batch))
    bb = min(bb, bb_vmem)
    if B >= 2:
        bb = min(bb, -(-B // 2))      # >= 2 grid steps -> both v7x TensorCores get work
    bb = max(1, min(bb, B))

    n_steps = -(-B // bb)             # cdiv; pad the batch axis instead of shrinking bb
    Bp = n_steps * bb
    x2 = x.reshape(B, C, FT)
    if Bp != B:
        x2 = jnp.pad(x2, ((0, Bp - B), (0, 0), (0, 0)))

    matmul_flops = 2 * Bp * (C * FT * P        # pooling
                             + Cr * C * P      # bottleneck
                             + C * Cr * P      # attention heads
                             + C * P * FT)     # gate broadcast matmuls
    cost = pl.CostEstimate(
        flops=matmul_flops + 2 * Bp * C * FT,  # + gate combine / apply (VPU)
        transcendentals=Bp * C * P,
        bytes_accessed=2 * Bp * C * FT * itemsize)

    out2 = pl.pallas_call(
        dtcf_kernel,
        out_shape=jax.ShapeDtypeStruct((Bp, C, FT), dt),
        grid_spec=pltpu.PrefetchScalarGridSpec(
            num_scalar_prefetch=0,
            grid=(n_steps,),
            in_specs=[
                pl.BlockSpec((bb, C, FT), lambda i: (i, 0, 0)),   # x (streamed)
                pl.BlockSpec((Cr, C), lambda i: (0, 0)),          # bottleneck (BN folded)
                pl.BlockSpec((C, Cr), lambda i: (0, 0)),          # time head
                pl.BlockSpec((C, Cr), lambda i: (0, 0)),          # freq head
                pl.BlockSpec((Cr, 1), lambda i: (0, 0)),          # BN shift
                pl.BlockSpec((FT, P), lambda i: (0, 0)),          # pooling matrix
                pl.BlockSpec((T, FT), lambda i: (0, 0)),          # time gate broadcast
                pl.BlockSpec((F, FT), lambda i: (0, 0)),          # freq gate broadcast
            ],
            out_specs=pl.BlockSpec((bb, C, FT), lambda i: (i, 0, 0)),
            scratch_shapes=[
                pltpu.VMEM((bb, C, P), jnp.float32),   # pooled stats
                pltpu.VMEM((bb, C, T), jnp.float32),   # time attention
                pltpu.VMEM((bb, C, F), jnp.float32),   # freq attention
            ],
        ),
        compiler_params=pltpu.CompilerParams(
            dimension_semantics=("parallel",),
            vmem_limit_bytes=_VMEM_LIMIT_BYTES),
        cost_estimate=cost,
    )(x2, wb_scaled, w_time.astype(jnp.float32), w_freq.astype(jnp.float32),
      bias, pool, exp_t, exp_f)

    if Bp != B:
        out2 = out2[:B]
    return out2.reshape(B, C, F, T)


def dtcf_reference(x, w_bottleneck, w_time, w_freq, gamma, beta, r_mean, r_var):
    """Pure-JAX mirror of the PyTorch forward (inference-mode BN)."""
    B, C, F, T = x.shape
    gti = jnp.mean(x, axis=2)                                     # (B, C, T) freq-avg pool
    gfi = jnp.mean(x, axis=3)                                     # (B, C, F) time-avg pool
    z = jnp.concatenate([gti, gfi], axis=-1)                      # (B, C, T+F)
    z = jnp.einsum('rc,bcp->brp', w_bottleneck, z)                # (B, Cr, T+F)
    scale = gamma / jnp.sqrt(r_var + _BN_EPS)
    shift = beta - r_mean * scale
    z = jnp.maximum(z * scale[None, :, None] + shift[None, :, None], 0.0)
    zt, zf = z[:, :, :T], z[:, :, T:]
    at = jax.nn.sigmoid(jnp.einsum('cr,brt->bct', w_time, zt))    # (B, C, T)
    af = jax.nn.sigmoid(jnp.einsum('cr,brf->bcf', w_freq, zf))    # (B, C, F)
    attn = at[:, :, None, :] * af[:, :, :, None]                  # (B, C, F, T)
    return x * attn


if __name__ == "__main__":
    B, C, F, T = 2, 16, 8, 16
    reduction = 8
    Cr = C // reduction

    key = jax.random.PRNGKey(0)
    kx, kb, kt, kf = jax.random.split(key, 4)

    x = jax.random.normal(kx, (B, C, F, T), dtype=jnp.float32)

    # deterministic "conv" weights (1x1 convs -> channel-mixing matrices)
    w_bottleneck = jax.random.normal(kb, (Cr, C), jnp.float32) / np.sqrt(C)
    w_time = jax.random.normal(kt, (C, Cr), jnp.float32) / np.sqrt(Cr)
    w_freq = jax.random.normal(kf, (C, Cr), jnp.float32) / np.sqrt(Cr)

    # deterministic BatchNorm parameters / running stats
    gamma = 1.0 + 0.1 * jnp.arange(Cr, dtype=jnp.float32)
    beta = 0.05 * jnp.arange(Cr, dtype=jnp.float32)
    r_mean = 0.02 * jnp.arange(Cr, dtype=jnp.float32)
    r_var = 1.0 + 0.03 * jnp.arange(Cr, dtype=jnp.float32)

    out = dtcf_attention(x, w_bottleneck, w_time, w_freq, gamma, beta, r_mean, r_var)
    out = jax.block_until_ready(out)

    ref = dtcf_reference(x, w_bottleneck, w_time, w_freq, gamma, beta, r_mean, r_var)
    np.testing.assert_allclose(np.asarray(out), np.asarray(ref), rtol=1e-5, atol=1e-5)

    print("KERNEL_OK")
</pallas_src>

<mosaic_0001>
module attributes {stable_mosaic.version = 11 : i64} {
  func.func @dtcf_kernel(%arg0: i32, %arg1: memref<1x16x128xf32, #tpu.memory_space<vmem>>, %arg2: memref<2x16xf32, #tpu.memory_space<vmem>>, %arg3: memref<16x2xf32, #tpu.memory_space<vmem>>, %arg4: memref<16x2xf32, #tpu.memory_space<vmem>>, %arg5: memref<2x1xf32, #tpu.memory_space<vmem>>, %arg6: memref<128x24xf32, #tpu.memory_space<vmem>>, %arg7: memref<16x128xf32, #tpu.memory_space<vmem>>, %arg8: memref<8x128xf32, #tpu.memory_space<vmem>>, %arg9: memref<1x16x128xf32, #tpu.memory_space<vmem>>, %arg10: memref<1x16x24xf32, #tpu.memory_space<vmem>>, %arg11: memref<1x16x16xf32, #tpu.memory_space<vmem>>, %arg12: memref<1x16x8xf32, #tpu.memory_space<vmem>>) attributes {dimension_semantics = [#tpu.dimension_semantics<parallel>], iteration_bounds = array<i64: 2>, scalar_prefetch = 0 : i64, scratch_operands = 3 : i64, tpu.core_type = #tpu.core_type<tc>, window_params = [{transform_indices = @transform_0, window_bounds = array<i64: 1, 16, 128>}, {pipeline_mode = #tpu.pipeline_mode<synchronous>, transform_indices = @transform_1, window_bounds = array<i64: 2, 16>}, {pipeline_mode = #tpu.pipeline_mode<synchronous>, transform_indices = @transform_2, window_bounds = array<i64: 16, 2>}, {pipeline_mode = #tpu.pipeline_mode<synchronous>, transform_indices = @transform_3, window_bounds = array<i64: 16, 2>}, {pipeline_mode = #tpu.pipeline_mode<synchronous>, transform_indices = @transform_4, window_bounds = array<i64: 2, 1>}, {pipeline_mode = #tpu.pipeline_mode<synchronous>, transform_indices = @transform_5, window_bounds = array<i64: 128, 24>}, {pipeline_mode = #tpu.pipeline_mode<synchronous>, transform_indices = @transform_6, window_bounds = array<i64: 16, 128>}, {pipeline_mode = #tpu.pipeline_mode<synchronous>, transform_indices = @transform_7, window_bounds = array<i64: 8, 128>}, {transform_indices = @transform_8, window_bounds = array<i64: 1, 16, 128>}]} {
    %c0 = arith.constant 0 : index
    %c0_0 = arith.constant 0 : index
    %c0_1 = arith.constant 0 : index
    %0 = vector.load %arg1[%c0, %c0_0, %c0_1] : memref<1x16x128xf32, #tpu.memory_space<vmem>>, vector<1x16x128xf32>
    %1 = vector.shape_cast %0 : vector<1x16x128xf32> to vector<16x128xf32>
    %c0_2 = arith.constant 0 : index
    %c0_3 = arith.constant 0 : index
    %2 = vector.load %arg6[%c0_2, %c0_3] : memref<128x24xf32, #tpu.memory_space<vmem>>, vector<128x24xf32>
    %cst = arith.constant dense<0.000000e+00> : vector<16x24xf32>
    %3 = tpu.matmul %1, %2, %cst {dimension_numbers = #tpu.dot_dimension_numbers<[1], [0], [0], [1], [0, 0, 1, 1], [], []>} : vector<16x128xf32>, vector<128x24xf32>, vector<16x24xf32> -> vector<16x24xf32>
    %4 = vector.shape_cast %3 : vector<16x24xf32> to vector<1x16x24xf32>
    %c0_4 = arith.constant 0 : index
    %c0_5 = arith.constant 0 : index
    %c0_6 = arith.constant 0 : index
    %5 = vector.load %arg10[%c0_4, %c0_5, %c0_6] : memref<1x16x24xf32, #tpu.memory_space<vmem>>, vector<1x16x24xf32>
    tpu.vector_store %arg10[%c0_4, %c0_5, %c0_6], %4 {strides = array<i32>} : memref<1x16x24xf32, #tpu.memory_space<vmem>>, vector<1x16x24xf32>,
    %c0_7 = arith.constant 0 : index
    %c0_8 = arith.constant 0 : index
    %6 = vector.load %arg2[%c0_7, %c0_8] : memref<2x16xf32, #tpu.memory_space<vmem>>, vector<2x16xf32>
    %c0_9 = arith.constant 0 : index
    %c0_10 = arith.constant 0 : index
    %7 = vector.load %arg3[%c0_9, %c0_10] : memref<16x2xf32, #tpu.memory_space<vmem>>, vector<16x2xf32>
    %c0_11 = arith.constant 0 : index
    %c0_12 = arith.constant 0 : index
    %8 = vector.load %arg4[%c0_11, %c0_12] : memref<16x2xf32, #tpu.memory_space<vmem>>, vector<16x2xf32>
    %c0_13 = arith.constant 0 : index
    %c0_14 = arith.constant 0 : index
    %9 = vector.load %arg5[%c0_13, %c0_14] : memref<2x1xf32, #tpu.memory_space<vmem>>, vector<2x1xf32>
    %c0_i32 = arith.constant 0 : i32
    %c1_i32 = arith.constant 1 : i32
    %10 = arith.muli %c0_i32, %c1_i32 : i32
    %c0_i32_15 = arith.constant 0 : i32
    %11 = arith.addi %c0_i32_15, %10 : i32
    %12 = arith.index_cast %11 : i32 to index
    %c0_16 = arith.constant 0 : index
    %c0_17 = arith.constant 0 : index
    %13 = vector.load %arg10[%12, %c0_16, %c0_17] : memref<1x16x24xf32, #tpu.memory_space<vmem>>, vector<1x16x24xf32>
    %14 = vector.shape_cast %13 : vector<1x16x24xf32> to vector<16x24xf32>
    %cst_18 = arith.constant dense<0.000000e+00> : vector<2x24xf32>
    %15 = tpu.matmul %6, %14, %cst_18 {dimension_numbers = #tpu.dot_dimension_numbers<[1], [0], [0], [1], [0, 0, 1, 1], [], []>} : vector<2x16xf32>, vector<16x24xf32>, vector<2x24xf32> -> vector<2x24xf32>
    %16 = vector.broadcast %9 : vector<2x1xf32> to vector<2x24xf32>
    %17 = arith.addf %15, %16 : vector<2x24xf32>
    %cst_19 = arith.constant 0.000000e+00 : f32
    %18 = vector.broadcast %cst_19 : f32 to vector<2x24xf32>
    %19 = arith.maximumf %17, %18 : vector<2x24xf32>
    %20 = vector.extract_strided_slice %19 {offsets = [0, 0], sizes = [2, 16], strides = [1, 1]} : vector<2x24xf32> to vector<2x16xf32>
    %cst_20 = arith.constant dense<0.000000e+00> : vector<16x16xf32>
    %21 = tpu.matmul %7, %20, %cst_20 {dimension_numbers = #tpu.dot_dimension_numbers<[1], [0], [0], [1], [0, 0, 1, 1], [], []>} : vector<16x2xf32>, vector<2x16xf32>, vector<16x16xf32> -> vector<16x16xf32>
    %22 = arith.negf %21 : vector<16x16xf32>
    %23 = math.exp %22 : vector<16x16xf32>
    %cst_21 = arith.constant 1.000000e+00 : f32
    %24 = vector.broadcast %cst_21 : f32 to vector<16x16xf32>
    %25 = arith.addf %24, %23 : vector<16x16xf32>
    %26 = arith.divf %24, %25 : vector<16x16xf32>
    %27 = arith.index_cast %11 : i32 to index
    %c0_22 = arith.constant 0 : index
    %c0_23 = arith.constant 0 : index
    %28 = vector.load %arg11[%27, %c0_22, %c0_23] : memref<1x16x16xf32, #tpu.memory_space<vmem>>, vector<1x16x16xf32>
    %29 = vector.shape_cast %28 : vector<1x16x16xf32> to vector<16x16xf32>
    %30 = vector.shape_cast %26 : vector<16x16xf32> to vector<1x16x16xf32>
    tpu.vector_store %arg11[%27, %c0_22, %c0_23], %30 {strides = array<i32>} : memref<1x16x16xf32, #tpu.memory_space<vmem>>, vector<1x16x16xf32>,
    %31 = vector.extract_strided_slice %19 {offsets = [0, 16], sizes = [2, 8], strides = [1, 1]} : vector<2x24xf32> to vector<2x8xf32>
    %cst_24 = arith.constant dense<0.000000e+00> : vector<16x8xf32>
    %32 = tpu.matmul %8, %31, %cst_24 {dimension_numbers = #tpu.dot_dimension_numbers<[1], [0], [0], [1], [0, 0, 1, 1], [], []>} : vector<16x2xf32>, vector<2x8xf32>, vector<16x8xf32> -> vector<16x8xf32>
    %33 = arith.negf %32 : vector<16x8xf32>
    %34 = math.exp %33 : vector<16x8xf32>
    %cst_25 = arith.constant 1.000000e+00 : f32
    %35 = vector.broadcast %cst_25 : f32 to vector<16x8xf32>
    %36 = arith.addf %35, %34 : vector<16x8xf32>
    %37 = arith.divf %35, %36 : vector<16x8xf32>
    %38 = arith.index_cast %11 : i32 to index
    %c0_26 = arith.constant 0 : index
    %c0_27 = arith.constant 0 : index
    %39 = vector.load %arg12[%38, %c0_26, %c0_27] : memref<1x16x8xf32, #tpu.memory_space<vmem>>, vector<1x16x8xf32>
    %40 = vector.shape_cast %39 : vector<1x16x8xf32> to vector<16x8xf32>
    %41 = vector.shape_cast %37 : vector<16x8xf32> to vector<1x16x8xf32>
    tpu.vector_store %arg12[%38, %c0_26, %c0_27], %41 {strides = array<i32>} : memref<1x16x8xf32, #tpu.memory_space<vmem>>, vector<1x16x8xf32>,
    %c1_i32_28 = arith.constant 1 : i32
    %c0_29 = arith.constant 0 : index
    %c0_30 = arith.constant 0 : index
    %c0_31 = arith.constant 0 : index
    %42 = vector.load %arg11[%c0_29, %c0_30, %c0_31] : memref<1x16x16xf32, #tpu.memory_space<vmem>>, vector<1x16x16xf32>
    %43 = vector.shape_cast %42 : vector<1x16x16xf32> to vector<16x16xf32>
    %c0_32 = arith.constant 0 : index
    %c0_33 = arith.constant 0 : index
    %c0_34 = arith.constant 0 : index
    %44 = vector.load %arg12[%c0_32, %c0_33, %c0_34] : memref<1x16x8xf32, #tpu.memory_space<vmem>>, vector<1x16x8xf32>
    %45 = vector.shape_cast %44 : vector<1x16x8xf32> to vector<16x8xf32>
    %c0_35 = arith.constant 0 : index
    %c0_36 = arith.constant 0 : index
    %46 = vector.load %arg7[%c0_35, %c0_36] : memref<16x128xf32, #tpu.memory_space<vmem>>, vector<16x128xf32>
    %cst_37 = arith.constant dense<0.000000e+00> : vector<16x128xf32>
    %47 = tpu.matmul %43, %46, %cst_37 {dimension_numbers = #tpu.dot_dimension_numbers<[1], [0], [0], [1], [0, 0, 1, 1], [], []>} : vector<16x16xf32>, vector<16x128xf32>, vector<16x128xf32> -> vector<16x128xf32>
    %c0_38 = arith.constant 0 : index
    %c0_39 = arith.constant 0 : index
    %48 = vector.load %arg8[%c0_38, %c0_39] : memref<8x128xf32, #tpu.memory_space<vmem>>, vector<8x128xf32>
    %cst_40 = arith.constant dense<0.000000e+00> : vector<16x128xf32>
    %49 = tpu.matmul %45, %48, %cst_40 {dimension_numbers = #tpu.dot_dimension_numbers<[1], [0], [0], [1], [0, 0, 1, 1], [], []>} : vector<16x8xf32>, vector<8x128xf32>, vector<16x128xf32> -> vector<16x128xf32>
    %50 = arith.mulf %47, %49 : vector<16x128xf32>
    %51 = arith.mulf %1, %50 : vector<16x128xf32>
    %52 = vector.shape_cast %51 : vector<16x128xf32> to vector<1x16x128xf32>
    %c0_41 = arith.constant 0 : index
    %c0_42 = arith.constant 0 : index
    %c0_43 = arith.constant 0 : index
    %53 = vector.load %arg9[%c0_41, %c0_42, %c0_43] : memref<1x16x128xf32, #tpu.memory_space<vmem>>, vector<1x16x128xf32>
    tpu.vector_store %arg9[%c0_41, %c0_42, %c0_43], %52 {strides = array<i32>} : memref<1x16x128xf32, #tpu.memory_space<vmem>>, vector<1x16x128xf32>,
    return
  }
  func.func @transform_0(%arg0: i32) -> (i32, i32, i32) {
    %c0_i32 = arith.constant 0 : i32
    %c0_i32_0 = arith.constant 0 : i32
    %c0_i32_1 = arith.constant 0 : i32
    return %arg0, %c0_i32, %c0_i32_0 : i32, i32, i32
  }
  func.func @transform_1(%arg0: i32) -> (i32, i32) {
    %c0_i32 = arith.constant 0 : i32
    %c0_i32_0 = arith.constant 0 : i32
    %c0_i32_1 = arith.constant 0 : i32
    return %c0_i32, %c0_i32_0 : i32, i32
  }
  func.func @transform_2(%arg0: i32) -> (i32, i32) {
    %c0_i32 = arith.constant 0 : i32
    %c0_i32_0 = arith.constant 0 : i32
    %c0_i32_1 = arith.constant 0 : i32
    return %c0_i32, %c0_i32_0 : i32, i32
  }
  func.func @transform_3(%arg0: i32) -> (i32, i32) {
    %c0_i32 = arith.constant 0 : i32
    %c0_i32_0 = arith.constant 0 : i32
    %c0_i32_1 = arith.constant 0 : i32
    return %c0_i32, %c0_i32_0 : i32, i32
  }
  func.func @transform_4(%arg0: i32) -> (i32, i32) {
    %c0_i32 = arith.constant 0 : i32
    %c0_i32_0 = arith.constant 0 : i32
    %c0_i32_1 = arith.constant 0 : i32
    return %c0_i32, %c0_i32_0 : i32, i32
  }
  func.func @transform_5(%arg0: i32) -> (i32, i32) {
    %c0_i32 = arith.constant 0 : i32
    %c0_i32_0 = arith.constant 0 : i32
    %c0_i32_1 = arith.constant 0 : i32
    return %c0_i32, %c0_i32_0 : i32, i32
  }
  func.func @transform_6(%arg0: i32) -> (i32, i32) {
    %c0_i32 = arith.constant 0 : i32
    %c0_i32_0 = arith.constant 0 : i32
    %c0_i32_1 = arith.constant 0 : i32
    return %c0_i32, %c0_i32_0 : i32, i32
  }
  func.func @transform_7(%arg0: i32) -> (i32, i32) {
    %c0_i32 = arith.constant 0 : i32
    %c0_i32_0 = arith.constant 0 : i32
    %c0_i32_1 = arith.constant 0 : i32
    return %c0_i32, %c0_i32_0 : i32, i32
  }
  func.func @transform_8(%arg0: i32) -> (i32, i32, i32) {
    %c0_i32 = arith.constant 0 : i32
    %c0_i32_0 = arith.constant 0 : i32
    %c0_i32_1 = arith.constant 0 : i32
    return %arg0, %c0_i32, %c0_i32_0 : i32, i32, i32
  }
}

</mosaic_0001>

<llo_original>
// kernel: dtcf_attention.1
$region0: #{dtcf_attention.1}
  #allocation0 [shape = 'u32[]', space=smem, size = 0x4, offset = 0x4, fixed_abs, tag = 'smem constant byte address 0x4 - core index']
  #allocation1 [shape = 'u32[144,128]{1,0:T(1,128)}', space=vmem, size = 0x12000, scoped, tag = 'internal scratch']
  #allocation2 [shape = 'f32[1,16,24]{2,1,0:T(8,128)}', space=vmem, size = 0x2000, scoped, tag = 'scratch operand']
  #allocation3 [shape = 'f32[1,16,16]{2,1,0:T(8,128)}', space=vmem, size = 0x2000, scoped, tag = 'scratch operand']
  #allocation4 [shape = 'f32[1,16,8]{2,1,0:T(8,128)}', space=vmem, size = 0x2000, scoped, tag = 'scratch operand']
  %s0 = inlined_call_operand.vmem [shape: f32[2,16,128], index: 0, kind: input, shape index: {}]
  %s1 = inlined_call_operand.vmem [shape: f32[2,16], index: 1, kind: input, shape index: {}]
  %s2 = inlined_call_operand.vmem [shape: f32[16,2], index: 2, kind: input, shape index: {}]
  %s3 = inlined_call_operand.vmem [shape: f32[16,2], index: 3, kind: input, shape index: {}]
  %s4 = inlined_call_operand.vmem [shape: f32[2,1], index: 4, kind: input, shape index: {}]
  %s5 = inlined_call_operand.vmem [shape: f32[128,24], index: 5, kind: input, shape index: {}]
  %s6 = inlined_call_operand.vmem [shape: f32[16,128], index: 6, kind: input, shape index: {}]
  %s7 = inlined_call_operand.vmem [shape: f32[8,128], index: 7, kind: input, shape index: {}]
  %s8 = inlined_call_operand.vmem [shape: f32[2,16,128], index: 8, kind: output, shape index: {}]
  %s9 = sld [smem:[#allocation0]]
  $region65: #{dtcf_attention.1} parent=0
    _
  %s11 = ssub.s32 1, %s9
  %s12 = scalar_select 0, %s11, %s9
  loop: start=0, step=1, limit=4
  $region2: #{dtcf_attention.1} parent=0 // loop_pre_header
    _
  $region3: #{dtcf_attention.1} parent=0 // loop_header
    %s14 = sphi 0, %s18
    %p15 = scmp.ge.s32.totalorder %s14, 4
    %s24 = sphi 0, %s26
    %s27 = sphi 0, %s24
    %s28 = sphi 0, %s27
    %s44 = sphi 0, %s28
    %s48 = sphi 0, %s48
    %s50 = sphi 0, %s48
    %s51 = sphi 0, %s50
    %s65 = sphi 0, %s51
    %s69 = sphi 0, %s69
    %s71 = sphi 0, %s69
    %s72 = sphi 0, %s71
    %s86 = sphi 0, %s72
    %s90 = sphi 0, %s90
    %s92 = sphi 0, %s90
    %s93 = sphi 0, %s92
    %s107 = sphi 0, %s93
    %s111 = sphi 0, %s111
    %s113 = sphi 0, %s111
    %s114 = sphi 0, %s113
    %s128 = sphi 0, %s114
    %s132 = sphi 0, %s132
    %s134 = sphi 0, %s132
    %s135 = sphi 0, %s134
    %s149 = sphi 0, %s135
    %s153 = sphi 0, %s153
    %s155 = sphi 0, %s153
    %s156 = sphi 0, %s155
    %s170 = sphi 0, %s156
    %s174 = sphi 0, %s174
    %s176 = sphi 0, %s174
    %s177 = sphi 0, %s176
    %s191 = sphi 0, %s177
    %s197 = sphi 0, %s199
    %s200 = sphi 0, %s197
    %s201 = sphi 0, %s200
    %s217 = sphi 0, %s201
  $region4: #{dtcf_attention.1} parent=0 // loop_header_branch
    %17 = sbr.rel (%p15) target = $region8
  $region5: #{dtcf_attention.1} parent=0 // loop_body
    %s19 = ssub.s32 %s14, 1
    %s20 = ssub.s32 %s14, 2
    %s21 = sadd.s32 %s14, 1
    %s22 = ssub.s32 %s14, %s21
    %p23 = scmp.eq.s32.totalorder %s22, 0
    %s25 = sadd.s32 %s24, 1
    %s26 = scalar_select %p23, %s24, %s25
    %p29 = pneg %p23
    %p30 = scmp.eq.s32.totalorder %s14, 1
    %p31 = por %p29, %p30
    %p32 = scmp.ne.s32.totalorder %s24, %s27
    %p33 = scmp.eq.s32.totalorder %s14, 0
    %p34 = por %p32, %p33
    %p35 = scmp.ne.s32.totalorder %s24, %s27
    %p36 = scmp.eq.s32.totalorder %s19, 1
    %p37 = por %p35, %p36
    %p38 = scmp.ne.s32.totalorder %s27, %s28
    %p39 = scmp.eq.s32.totalorder %s19, 0
    %p40 = por %p38, %p39
    %p41 = scmp.ne.s32.totalorder %s27, %s28
    %p42 = scmp.eq.s32.totalorder %s20, 1
    %p43 = por %p41, %p42
    %p45 = scmp.ne.s32.totalorder %s28, %s44
    %p46 = scmp.eq.s32.totalorder %s20, 0
    %p47 = por %p45, %p46
    %s49 = sadd.s32 %s48, 1
    %p52 = scmp.eq.s32.totalorder %s14, 1
    %p53 = scmp.ne.s32.totalorder %s48, %s50
    %p54 = scmp.eq.s32.totalorder %s14, 0
    %p55 = por %p53, %p54
    %p56 = scmp.ne.s32.totalorder %s48, %s50
    %p57 = scmp.eq.s32.totalorder %s19, 1
    %p58 = por %p56, %p57
    %p59 = scmp.ne.s32.totalorder %s50, %s51
    %p60 = scmp.eq.s32.totalorder %s19, 0
    %p61 = por %p59, %p60
    %p62 = scmp.ne.s32.totalorder %s50, %s51
    %p63 = scmp.eq.s32.totalorder %s20, 1
    %p64 = por %p62, %p63
    %p66 = scmp.ne.s32.totalorder %s51, %s65
    %p67 = scmp.eq.s32.totalorder %s20, 0
    %p68 = por %p66, %p67
    %s70 = sadd.s32 %s69, 1
    %p73 = scmp.eq.s32.totalorder %s14, 1
    %p74 = scmp.ne.s32.totalorder %s69, %s71
    %p75 = scmp.eq.s32.totalorder %s14, 0
    %p76 = por %p74, %p75
    %p77 = scmp.ne.s32.totalorder %s69, %s71
    %p78 = scmp.eq.s32.totalorder %s19, 1
    %p79 = por %p77, %p78
    %p80 = scmp.ne.s32.totalorder %s71, %s72
    %p81 = scmp.eq.s32.totalorder %s19, 0
    %p82 = por %p80, %p81
    %p83 = scmp.ne.s32.totalorder %s71, %s72
    %p84 = scmp.eq.s32.totalorder %s20, 1
    %p85 = por %p83, %p84
    %p87 = scmp.ne.s32.totalorder %s72, %s86
    %p88 = scmp.eq.s32.totalorder %s20, 0
    %p89 = por %p87, %p88
    %s91 = sadd.s32 %s90, 1
    %p94 = scmp.eq.s32.totalorder %s14, 1
    %p95 = scmp.ne.s32.totalorder %s90, %s92
    %p96 = scmp.eq.s32.totalorder %s14, 0
    %p97 = por %p95, %p96
    %p98 = scmp.ne.s32.totalorder %s90, %s92
    %p99 = scmp.eq.s32.totalorder %s19, 1
    %p100 = por %p98, %p99
    %p101 = scmp.ne.s32.totalorder %s92, %s93
    %p102 = scmp.eq.s32.totalorder %s19, 0
    %p103 = por %p101, %p102
    %p104 = scmp.ne.s32.totalorder %s92, %s93
    %p105 = scmp.eq.s32.totalorder %s20, 1
    %p106 = por %p104, %p105
    %p108 = scmp.ne.s32.totalorder %s93, %s107
    %p109 = scmp.eq.s32.totalorder %s20, 0
    %p110 = por %p108, %p109
    %s112 = sadd.s32 %s111, 1
    %p115 = scmp.eq.s32.totalorder %s14, 1
    %p116 = scmp.ne.s32.totalorder %s111, %s113
    %p117 = scmp.eq.s32.totalorder %s14, 0
    %p118 = por %p116, %p117
    %p119 = scmp.ne.s32.totalorder %s111, %s113
    %p120 = scmp.eq.s32.totalorder %s19, 1
    %p121 = por %p119, %p120
    %p122 = scmp.ne.s32.totalorder %s113, %s114
    %p123 = scmp.eq.s32.totalorder %s19, 0
    %p124 = por %p122, %p123
    %p125 = scmp.ne.s32.totalorder %s113, %s114
    %p126 = scmp.eq.s32.totalorder %s20, 1
    %p127 = por %p125, %p126
    %p129 = scmp.ne.s32.totalorder %s114, %s128
    %p130 = scmp.eq.s32.totalorder %s20, 0
    %p131 = por %p129, %p130
    %s133 = sadd.s32 %s132, 1
    %p136 = scmp.eq.s32.totalorder %s14, 1
    %p137 = scmp.ne.s32.totalorder %s132, %s134
    %p138 = scmp.eq.s32.totalorder %s14, 0
    %p139 = por %p137, %p138
    %p140 = scmp.ne.s32.totalorder %s132, %s134
    %p141 = scmp.eq.s32.totalorder %s19, 1
    %p142 = por %p140, %p141
    %p143 = scmp.ne.s32.totalorder %s134, %s135
    %p144 = scmp.eq.s32.totalorder %s19, 0
    %p145 = por %p143, %p144
    %p146 = scmp.ne.s32.totalorder %s134, %s135
    %p147 = scmp.eq.s32.totalorder %s20, 1
    %p148 = por %p146, %p147
    %p150 = scmp.ne.s32.totalorder %s135, %s149
    %p151 = scmp.eq.s32.totalorder %s20, 0
    %p152 = por %p150, %p151
    %s154 = sadd.s32 %s153, 1
    %p157 = scmp.eq.s32.totalorder %s14, 1
    %p158 = scmp.ne.s32.totalorder %s153, %s155
    %p159 = scmp.eq.s32.totalorder %s14, 0
    %p160 = por %p158, %p159
    %p161 = scmp.ne.s32.totalorder %s153, %s155
    %p162 = scmp.eq.s32.totalorder %s19, 1
    %p163 = por %p161, %p162
    %p164 = scmp.ne.s32.totalorder %s155, %s156
    %p165 = scmp.eq.s32.totalorder %s19, 0
    %p166 = por %p164, %p165
    %p167 = scmp.ne.s32.totalorder %s155, %s156
    %p168 = scmp.eq.s32.totalorder %s20, 1
    %p169 = por %p167, %p168
    %p171 = scmp.ne.s32.totalorder %s156, %s170
    %p172 = scmp.eq.s32.totalorder %s20, 0
    %p173 = por %p171, %p172
    %s175 = sadd.s32 %s174, 1
    %p178 = scmp.eq.s32.totalorder %s14, 1
    %p179 = scmp.ne.s32.totalorder %s174, %s176
    %p180 = scmp.eq.s32.totalorder %s14, 0
    %p181 = por %p179, %p180
    %p182 = scmp.ne.s32.totalorder %s174, %s176
    %p183 = scmp.eq.s32.totalorder %s19, 1
    %p184 = por %p182, %p183
    %p185 = scmp.ne.s32.totalorder %s176, %s177
    %p186 = scmp.eq.s32.totalorder %s19, 0
    %p187 = por %p185, %p186
    %p188 = scmp.ne.s32.totalorder %s176, %s177
    %p189 = scmp.eq.s32.totalorder %s20, 1
    %p190 = por %p188, %p189
    %p192 = scmp.ne.s32.totalorder %s177, %s191
    %p193 = scmp.eq.s32.totalorder %s20, 0
    %p194 = por %p192, %p193
    %s195 = ssub.s32 %s14, %s21
    %p196 = scmp.eq.s32.totalorder %s195, 0
    %s198 = sadd.s32 %s197, 1
    %s199 = scalar_select %p196, %s197, %s198
    %p202 = pneg %p196
    %p203 = scmp.eq.s32.totalorder %s14, 1
    %p204 = por %p202, %p203
    %p205 = scmp.ne.s32.totalorder %s197, %s200
    %p206 = scmp.eq.s32.totalorder %s14, 0
    %p207 = por %p205, %p206
    %p208 = scmp.ne.s32.totalorder %s197, %s200
    %p209 = scmp.eq.s32.totalorder %s19, 1
    %p210 = por %p208, %p209
    %p211 = scmp.ne.s32.totalorder %s200, %s201
    %p212 = scmp.eq.s32.totalorder %s19, 0
    %p213 = por %p211, %p212
    %p214 = scmp.ne.s32.totalorder %s200, %s201
    %p215 = scmp.eq.s32.totalorder %s20, 1
    %p216 = por %p214, %p215
    %p218 = scmp.ne.s32.totalorder %s201, %s217
    %p219 = scmp.eq.s32.totalorder %s20, 0
    %p220 = por %p218, %p219
    %p221 = scmp.le.s32.totalorder 1, %s14
    %p222 = scmp.lt.s32.totalorder %s14, 3
    %p223 = pnand %p221, %p222
    %p224 = pneg %p223
    // Predicated region
    $region9: #{dtcf_attention.1} parent=5 // pred_check
      _
    $region10: #{dtcf_attention.1} parent=5 // pred_check_branch
      %226 = sbr.rel (%p223) target = $region12
    $region11: #{dtcf_attention.1} parent=5 // pred_region
      %s227 = ssub.s32 %s14, 1
      // Predicated region
      $region13: #{dtcf_attention.1} parent=11 // pred_check
        %p228 = pneg %p61
      $region14: #{dtcf_attention.1} parent=11 // pred_check_branch
        %230 = sbr.rel (%p228) target = $region16
      $region15: #{dtcf_attention.1} parent=11 // pred_region
        _
      $region16: #{dtcf_attention.1} parent=11 // pred_fallthru
        _
      // Predicated region
      $region17: #{dtcf_attention.1} parent=11 // pred_check
        %p231 = pneg %p82
      $region18: #{dtcf_attention.1} parent=11 // pred_check_branch
        %233 = sbr.rel (%p231) target = $region20
      $region19: #{dtcf_attention.1} parent=11 // pred_region
        _
      $region20: #{dtcf_attention.1} parent=11 // pred_fallthru
        _
      // Predicated region
      $region21: #{dtcf_attention.1} parent=11 // pred_check
        %p234 = pneg %p103
      $region22: #{dtcf_attention.1} parent=11 // pred_check_branch
        %236 = sbr.rel (%p234) target = $region24
      $region23: #{dtcf_attention.1} parent=11 // pred_region
        _
      $region24: #{dtcf_attention.1} parent=11 // pred_fallthru
        _
      // Predicated region
      $region25: #{dtcf_attention.1} parent=11 // pred_check
        %p237 = pneg %p124
      $region26: #{dtcf_attention.1} parent=11 // pred_check_branch
        %239 = sbr.rel (%p237) target = $region28
      $region27: #{dtcf_attention.1} parent=11 // pred_region
        _
      $region28: #{dtcf_attention.1} parent=11 // pred_fallthru
        _
      // Predicated region
      $region29: #{dtcf_attention.1} parent=11 // pred_check
        %p240 = pneg %p145
      $region30: #{dtcf_attention.1} parent=11 // pred_check_branch
        %242 = sbr.rel (%p240) target = $region32
      $region31: #{dtcf_attention.1} parent=11 // pred_region
        _
      $region32: #{dtcf_attention.1} parent=11 // pred_fallthru
        _
      // Predicated region
      $region33: #{dtcf_attention.1} parent=11 // pred_check
        %p243 = pneg %p166
      $region34: #{dtcf_attention.1} parent=11 // pred_check_branch
        %245 = sbr.rel (%p243) target = $region36
      $region35: #{dtcf_attention.1} parent=11 // pred_region
        _
      $region36: #{dtcf_attention.1} parent=11 // pred_fallthru
        _
      // Predicated region
      $region37: #{dtcf_attention.1} parent=11 // pred_check
        %p246 = pneg %p187
      $region38: #{dtcf_attention.1} parent=11 // pred_check_branch
        %248 = sbr.rel (%p246) target = $region40
      $region39: #{dtcf_attention.1} parent=11 // pred_region
        _
      $region40: #{dtcf_attention.1} parent=11 // pred_fallthru
        _
    $region12: #{dtcf_attention.1} parent=5 // pred_fallthru
      _
    %p249 = scmp.lt.s32.totalorder %s14, 2
    // Predicated region
    $region41: #{dtcf_attention.1} parent=5 // pred_check
      %p250 = pneg %p249
    $region42: #{dtcf_attention.1} parent=5 // pred_check_branch
      %252 = sbr.rel (%p250) target = $region44
    $region43: #{dtcf_attention.1} parent=5 // pred_region
      // Predicated region
      $region45: #{dtcf_attention.1} parent=43 // pred_check
        %p253 = pneg %p34
      $region46: #{dtcf_attention.1} parent=43 // pred_check_branch
        %255 = sbr.rel (%p253) target = $region48
      $region47: #{dtcf_attention.1} parent=43 // pred_region
        %p256 = scmp.lt.s32.totalorder %s14, 1
        %s257 = scalar_select %p256, %s14, 1
        %s258 = smul.addr %s257, 2
        %s259 = smul.addr %s258, 8
        %s260 = scalar_lea.vmem %s0, %s259
      $region48: #{dtcf_attention.1} parent=43 // pred_fallthru
        _
    $region44: #{dtcf_attention.1} parent=5 // pred_fallthru
      _
    %p261 = scmp.le.s32.totalorder 1, %s14
    %p262 = scmp.lt.s32.totalorder %s14, 3
    %p263 = pnand %p261, %p262
    %p264 = pneg %p263
    // Predicated region
    $region49: #{dtcf_attention.1} parent=5 // pred_check
      _
    $region50: #{dtcf_attention.1} parent=5 // pred_check_branch
      %266 = sbr.rel (%p263) target = $region52
    $region51: #{dtcf_attention.1} parent=5 // pred_region
      %s267 = ssub.s32 %s14, 1
      %p268 = scmp.lt.s32.totalorder %s19, 1
      %s269 = scalar_select %p268, %s19, 1
      %s270 = smul.addr %s269, 2
      %s271 = smul.addr %s270, 8
      %s272 = scalar_lea.vmem %s0, %s271
      %p273 = pneg %p40
      %p274 = pneg %p37
      %p275 = pneg %p61
      %p276 = pneg %p58
      %p277 = pneg %p82
      %p278 = pneg %p79
      %p279 = pneg %p103
      %p280 = pneg %p100
      %p281 = pneg %p124
      %p282 = pneg %p121
      %p283 = pneg %p145
      %p284 = pneg %p142
      %p285 = pneg %p166
      %p286 = pneg %p163
      %p287 = pneg %p187
      %p288 = pneg %p184
      %p289 = pneg %p213
      %p290 = pneg %p210
      %p291 = scmp.lt.s32.totalorder %s19, 1
      %s292 = scalar_select %p291, %s19, 1
      %s293 = smul.addr %s292, 2
      %s294 = smul.addr %s293, 8
      %s295 = scalar_lea.vmem %s8, %s294
      %p296 = scmp.lt.s32.totalorder %s19, 1
      %s297 = scalar_select %p296, %s19, 1
      %s298 = smul.addr %s297, 2
      %s299 = smul.addr %s298, 8
      %s300 = scalar_lea.vmem %s0, %s299
      %p301 = scmp.lt.s32.totalorder %s19, 1
      %s302 = scalar_select %p301, %s19, 1
      %s303 = smul.addr %s302, 2
      %s304 = smul.addr %s303, 8
      %s305 = scalar_lea.vmem %s8, %s304
      %v306 = vld [vmem:[%s300] sm:$0xff]
      %v307 = vld [vmem:[%s300 + $0x8] sm:$0xff]
      %v308 = vld [vmem:[%s5] sm:$0xff]
      %v309 = vld [vmem:[%s5 + $0x8] sm:$0xff]
      %v310 = vld [vmem:[%s5 + $0x10] sm:$0xff]
      %v311 = vld [vmem:[%s5 + $0x18] sm:$0xff]
      %v312 = vld [vmem:[%s5 + $0x20] sm:$0xff]
      %v313 = vld [vmem:[%s5 + $0x28] sm:$0xff]
      %v314 = vld [vmem:[%s5 + $0x30] sm:$0xff]
      %v315 = vld [vmem:[%s5 + $0x38] sm:$0xff]
      %v316 = vld [vmem:[%s5 + $0x40] sm:$0xff]
      %v317 = vld [vmem:[%s5 + $0x48] sm:$0xff]
      %v318 = vld [vmem:[%s5 + $0x50] sm:$0xff]
      %v319 = vld [vmem:[%s5 + $0x58] sm:$0xff]
      %v320 = vld [vmem:[%s5 + $0x60] sm:$0xff]
      %v321 = vld [vmem:[%s5 + $0x68] sm:$0xff]
      %v322 = vld [vmem:[%s5 + $0x70] sm:$0xff]
      %v323 = vld [vmem:[%s5 + $0x78] sm:$0xff]
      %324 = vmatprep.subr.mxu0 0.0
      %325 = vmatpush1.msra.mxu0 %v308
      %326 = vmatprep.subr.mxu0 0.0
      %327 = vmatpush1.msra.mxu0 %v309
      %328 = vmatprep.subr.mxu0 0.0
      %329 = vmatpush1.msra.mxu0 %v310
      %330 = vmatprep.subr.mxu0 0.0
      %331 = vmatpush1.msra.mxu0 %v311
      %332 = vmatprep.subr.mxu0 0.0
      %333 = vmatpush1.msra.mxu0 %v312
      %334 = vmatprep.subr.mxu0 0.0
      %335 = vmatpush1.msra.mxu0 %v313
      %336 = vmatprep.subr.mxu0 0.0
      %337 = vmatpush1.msra.mxu0 %v314
      %338 = vmatprep.subr.mxu0 0.0
      %339 = vmatpush1.msra.mxu0 %v315
      %340 = vmatprep.subr.mxu0 0.0
      %341 = vmatpush1.msra.mxu0 %v316
      %342 = vmatprep.subr.mxu0 0.0
      %343 = vmatpush1.msra.mxu0 %v317
      %344 = vmatprep.subr.mxu0 0.0
      %345 = vmatpush1.msra.mxu0 %v318
      %346 = vmatprep.subr.mxu0 0.0
      %347 = vmatpush1.msra.mxu0 %v319
      %348 = vmatprep.subr.mxu0 0.0
      %349 = vmatpush1.msra.mxu0 %v320
      %350 = vmatprep.subr.mxu0 0.0
      %351 = vmatpush1.msra.mxu0 %v321
      %352 = vmatprep.subr.mxu0 0.0
      %353 = vmatpush1.msra.mxu0 %v322
      %354 = vmatprep.subr.mxu0 0.0
      %355 = vmatpush1.msra.mxu0 %v323
      %356 = vmatprep.subr.mxu0 0.0
      %357 = vmatpush1.msra.mxu0 0.0
      %358 = vmatprep.subr.mxu0 0.0
      %359 = vmatpush1.msra.mxu0 0.0
      %360 = vmatprep.subr.mxu0 0.0
      %361 = vmatpush1.msra.mxu0 0.0
      %362 = vmatprep.subr.mxu0 0.0
      %363 = vmatpush1.msra.mxu0 0.0
      %364 = vmatprep.subr.mxu0 0.0
      %365 = vmatpush1.msra.mxu0 0.0
      %366 = vmatprep.subr.mxu0 0.0
      %367 = vmatpush1.msra.mxu0 0.0
      %368 = vmatprep.subr.mxu0 0.0
      %369 = vmatpush1.msra.mxu0 0.0
      %370 = vmatprep.subr.mxu0 0.0
      %371 = vmatpush1.msra.mxu0 0.0
      %372 = vmatprep.subr.mxu0 0.0
      %373 = vmatpush1.msra.mxu0 0.0
      %374 = vmatprep.subr.mxu0 0.0
      %375 = vmatpush1.msra.mxu0 0.0
      %376 = vmatprep.subr.mxu0 0.0
      %377 = vmatpush1.msra.mxu0 0.0
      %378 = vmatprep.subr.mxu0 0.0
      %379 = vmatpush1.msra.mxu0 0.0
      %380 = vmatprep.subr.mxu0 0.0
      %381 = vmatpush1.msra.mxu0 0.0
      %382 = vmatprep.subr.mxu0 0.0
      %383 = vmatpush1.msra.mxu0 0.0
      %384 = vmatprep.subr.mxu0 0.0
      %385 = vmatpush1.msra.mxu0 0.0
      %386 = vmatprep.subr.mxu0 0.0
      %387 = vmatpush1.msra.mxu0 0.0
      %388 = vmatprep.mubr.f32.mxu0 0.0
      %389 = vmatmul.mubr.f32.gmra.mrb[0].mxu0 %v306
      %v390 = vpop.f32.mrb[0].mxu0
      %v391 = vadd.f32 0.0, %v390
      %v392 = vpop.f32.mrb[0].mxu0
      %393 = vmatprep.mubr.f32.mxu0 0.0
      %394 = vmatmul.mubr.f32.gmra.mrb[0].mxu0 %v307
      %v395 = vpop.f32.mrb[0].mxu0
      %v396 = vadd.f32 0.0, %v395
      %v397 = vpop.f32.mrb[0].mxu0
      %398 = vdwg.mxu0
      %vm399 = vcmask 195584
      %400 = vst.msk [vmem:[#allocation2] sm:$0xff] %vm399, %v391
      %401 = vst.msk [vmem:[#allocation2 + $0x8] sm:$0xff] %vm399, %v396
      %v402 = vld [vmem:[%s1] sm:$0x3]
      %v403 = vld [vmem:[%s2] sm:$0xff]
      %v404 = vld [vmem:[%s2 + $0x8] sm:$0xff]
      %v405 = vld [vmem:[%s3] sm:$0xff]
      %v406 = vld [vmem:[%s3 + $0x8] sm:$0xff]
      %v407 = vld [vmem:[%s4] sm:$0x3]
      %v408 = vld [vmem:[#allocation2] sm:$0xff]
      %v409 = vld [vmem:[#allocation2 + $0x8] sm:$0xff]
      %411 = vset.pattern.permute.xlu0 0
      %412 = vperm.xlu0 %411, %v407
      %v413 = vpop.permute.xlu0 %412
      %vm415 = vcmask 130048
      %v417 = vsel %vm415, %v402, 0
      %419 = vmatprep.subr.mxu0 0.0
      %420 = vmatpush1.msra.mxu0 %v408
      %421 = vmatprep.subr.mxu0 0.0
      %422 = vmatpush1.msra.mxu0 %v409
      %423 = vmatprep.subr.mxu0 0.0
      %424 = vmatpush1.msra.mxu0 0.0
      %425 = vmatprep.subr.mxu0 0.0
      %426 = vmatpush1.msra.mxu0 0.0
      %427 = vmatprep.subr.mxu0 0.0
      %428 = vmatpush1.msra.mxu0 0.0
      %429 = vmatprep.subr.mxu0 0.0
      %430 = vmatpush1.msra.mxu0 0.0
      %431 = vmatprep.subr.mxu0 0.0
      %432 = vmatpush1.msra.mxu0 0.0
      %433 = vmatprep.subr.mxu0 0.0
      %434 = vmatpush1.msra.mxu0 0.0
      %435 = vmatprep.subr.mxu0 0.0
      %436 = vmatpush1.msra.mxu0 0.0
      %437 = vmatprep.subr.mxu0 0.0
      %438 = vmatpush1.msra.mxu0 0.0
      %439 = vmatprep.subr.mxu0 0.0
      %440 = vmatpush1.msra.mxu0 0.0
      %441 = vmatprep.subr.mxu0 0.0
      %442 = vmatpush1.msra.mxu0 0.0
      %443 = vmatprep.subr.mxu0 0.0
      %444 = vmatpush1.msra.mxu0 0.0
      %445 = vmatprep.subr.mxu0 0.0
      %446 = vmatpush1.msra.mxu0 0.0
      %447 = vmatprep.subr.mxu0 0.0
      %448 = vmatpush1.msra.mxu0 0.0
      %449 = vmatprep.subr.mxu0 0.0
      %450 = vmatpush1.msra.mxu0 0.0
      %451 = vmatprep.subr.mxu0 0.0
      %452 = vmatpush1.msra.mxu0 0.0
      %453 = vmatprep.subr.mxu0 0.0
      %454 = vmatpush1.msra.mxu0 0.0
      %455 = vmatprep.subr.mxu0 0.0
      %456 = vmatpush1.msra.mxu0 0.0
      %457 = vmatprep.subr.mxu0 0.0
      %458 = vmatpush1.msra.mxu0 0.0
      %459 = vmatprep.subr.mxu0 0.0
      %460 = vmatpush1.msra.mxu0 0.0
      %461 = vmatprep.subr.mxu0 0.0
      %462 = vmatpush1.msra.mxu0 0.0
      %463 = vmatprep.subr.mxu0 0.0
      %464 = vmatpush1.msra.mxu0 0.0
      %465 = vmatprep.subr.mxu0 0.0
      %466 = vmatpush1.msra.mxu0 0.0
      %467 = vmatprep.subr.mxu0 0.0
      %468 = vmatpush1.msra.mxu0 0.0
      %469 = vmatprep.subr.mxu0 0.0
      %470 = vmatpush1.msra.mxu0 0.0
      %471 = vmatprep.subr.mxu0 0.0
      %472 = vmatpush1.msra.mxu0 0.0
      %473 = vmatprep.subr.mxu0 0.0
      %474 = vmatpush1.msra.mxu0 0.0
      %475 = vmatprep.subr.mxu0 0.0
      %476 = vmatpush1.msra.mxu0 0.0
      %477 = vmatprep.subr.mxu0 0.0
      %478 = vmatpush1.msra.mxu0 0.0
      %479 = vmatprep.subr.mxu0 0.0
      %480 = vmatpush1.msra.mxu0 0.0
      %481 = vmatprep.subr.mxu0 0.0
      %482 = vmatpush1.msra.mxu0 0.0
      %483 = vmatprep.mubr.f32.mxu0 0.0
      %484 = vmatmul.mubr.f32.gmra.mrb[0].mxu0 %v417
      %v485 = vpop.f32.mrb[0].mxu0
      %v486 = vadd.f32 %v413, %v485
      %v487 = vpop.f32.mrb[0].mxu0
      %488 = vdwg.mxu0
      %v489 = vmax.f32 %v486, 0.0
      %vm490 = vcmask 15360
      %v492 = vsel %vm490, %v403, 0
      %v495 = vsel %vm490, %v404, 0
      %vm497 = vcmask 1041408
      %v499 = vsel %vm497, %v489, 0
      %501 = vmatprep.subr.mxu0 0.0
      %502 = vmatpush1.msra.mxu0 %v499
      %503 = vmatprep.subr.mxu0 0.0
      %504 = vmatpush1.msra.mxu0 0.0
      %505 = vmatprep.subr.mxu0 0.0
      %506 = vmatpush1.msra.mxu0 0.0
      %507 = vmatprep.subr.mxu0 0.0
      %508 = vmatpush1.msra.mxu0 0.0
      %509 = vmatprep.subr.mxu0 0.0
      %510 = vmatpush1.msra.mxu0 0.0
      %511 = vmatprep.subr.mxu0 0.0
      %512 = vmatpush1.msra.mxu0 0.0
      %513 = vmatprep.subr.mxu0 0.0
      %514 = vmatpush1.msra.mxu0 0.0
      %515 = vmatprep.subr.mxu0 0.0
      %516 = vmatpush1.msra.mxu0 0.0
      %517 = vmatprep.subr.mxu0 0.0
      %518 = vmatpush1.msra.mxu0 0.0
      %519 = vmatprep.subr.mxu0 0.0
      %520 = vmatpush1.msra.mxu0 0.0
      %521 = vmatprep.subr.mxu0 0.0
      %522 = vmatpush1.msra.mxu0 0.0
      %523 = vmatprep.subr.mxu0 0.0
      %524 = vmatpush1.msra.mxu0 0.0
      %525 = vmatprep.subr.mxu0 0.0
      %526 = vmatpush1.msra.mxu0 0.0
      %527 = vmatprep.subr.mxu0 0.0
      %528 = vmatpush1.msra.mxu0 0.0
      %529 = vmatprep.subr.mxu0 0.0
      %530 = vmatpush1.msra.mxu0 0.0
      %531 = vmatprep.subr.mxu0 0.0
      %532 = vmatpush1.msra.mxu0 0.0
      %533 = vmatprep.subr.mxu0 0.0
      %534 = vmatpush1.msra.mxu0 0.0
      %535 = vmatprep.subr.mxu0 0.0
      %536 = vmatpush1.msra.mxu0 0.0
      %537 = vmatprep.subr.mxu0 0.0
      %538 = vmatpush1.msra.mxu0 0.0
      %539 = vmatprep.subr.mxu0 0.0
      %540 = vmatpush1.msra.mxu0 0.0
      %541 = vmatprep.subr.mxu0 0.0
      %542 = vmatpush1.msra.mxu0 0.0
      %543 = vmatprep.subr.mxu0 0.0
      %544 = vmatpush1.msra.mxu0 0.0
      %545 = vmatprep.subr.mxu0 0.0
      %546 = vmatpush1.msra.mxu0 0.0
      %547 = vmatprep.subr.mxu0 0.0
      %548 = vmatpush1.msra.mxu0 0.0
      %549 = vmatprep.subr.mxu0 0.0
      %550 = vmatpush1.msra.mxu0 0.0
      %551 = vmatprep.subr.mxu0 0.0
      %552 = vmatpush1.msra.mxu0 0.0
      %553 = vmatprep.subr.mxu0 0.0
      %554 = vmatpush1.msra.mxu0 0.0
      %555 = vmatprep.subr.mxu0 0.0
      %556 = vmatpush1.msra.mxu0 0.0
      %557 = vmatprep.subr.mxu0 0.0
      %558 = vmatpush1.msra.mxu0 0.0
      %559 = vmatprep.subr.mxu0 0.0
      %560 = vmatpush1.msra.mxu0 0.0
      %561 = vmatprep.subr.mxu0 0.0
      %562 = vmatpush1.msra.mxu0 0.0
      %563 = vmatprep.subr.mxu0 0.0
      %564 = vmatpush1.msra.mxu0 0.0
      %565 = vmatprep.mubr.f32.mxu0 0.0
      %566 = vmatmul.mubr.f32.gmra.mrb[0].mxu0 %v492
      %v567 = vpop.f32.mrb[0].mxu0
      %v568 = vadd.f32 0.0, %v567
      %v569 = vpop.f32.mrb[0].mxu0
      %570 = vmatprep.mubr.f32.mxu0 0.0
      %571 = vmatmul.mubr.f32.gmra.mrb[0].mxu0 %v495
      %v572 = vpop.f32.mrb[0].mxu0
      %v573 = vadd.f32 0.0, %v572
      %v574 = vpop.f32.mrb[0].mxu0
      %575 = vdwg.mxu0
      %v576 = vxor.u32 %v568, 2147483648
      %v577 = vxor.u32 %v573, 2147483648
      %v578 = vmul.f32 %v576, 1.442695
      %v579 = vpow.pop %v578
      %v580 = vmul.f32 %v577, 1.442695
      %v581 = vpow.pop %v580
      %v582 = vadd.f32 %v579, 1.0
      %v583 = vadd.f32 %v581, 1.0
      %v584 = vrcp.pop %v582
      %v585 = vmul.f32 1.0, %v584
      %v586 = vrcp.pop %v583
      %v587 = vmul.f32 1.0, %v586
      %588 = vst.msk [vmem:[#allocation3] sm:$0xff] %vm415, %v585
      %589 = vst.msk [vmem:[#allocation3 + $0x8] sm:$0xff] %vm415, %v587
      %590 = vrot.lane.b32.xlu0 %v489, 112
      %v591 = vpop.permute.xlu0 %590
      %v593 = vsel %vm490, %v405, 0
      %v596 = vsel %vm490, %v406, 0
      %v598 = vsel %vm497, %v591, 0
      %600 = vmatprep.subr.mxu0 0.0
      %601 = vmatpush1.msra.mxu0 %v598
      %602 = vmatprep.subr.mxu0 0.0
      %603 = vmatpush1.msra.mxu0 0.0
      %604 = vmatprep.subr.mxu0 0.0
      %605 = vmatpush1.msra.mxu0 0.0
      %606 = vmatprep.subr.mxu0 0.0
      %607 = vmatpush1.msra.mxu0 0.0
      %608 = vmatprep.subr.mxu0 0.0
      %609 = vmatpush1.msra.mxu0 0.0
      %610 = vmatprep.subr.mxu0 0.0
      %611 = vmatpush1.msra.mxu0 0.0
      %612 = vmatprep.subr.mxu0 0.0
      %613 = vmatpush1.msra.mxu0 0.0
      %614 = vmatprep.subr.mxu0 0.0
      %615 = vmatpush1.msra.mxu0 0.0
      %616 = vmatprep.subr.mxu0 0.0
      %617 = vmatpush1.msra.mxu0 0.0
      %618 = vmatprep.subr.mxu0 0.0
      %619 = vmatpush1.msra.mxu0 0.0
      %620 = vmatprep.subr.mxu0 0.0
      %621 = vmatpush1.msra.mxu0 0.0
      %622 = vmatprep.subr.mxu0 0.0
      %623 = vmatpush1.msra.mxu0 0.0
      %624 = vmatprep.subr.mxu0 0.0
      %625 = vmatpush1.msra.mxu0 0.0
      %626 = vmatprep.subr.mxu0 0.0
      %627 = vmatpush1.msra.mxu0 0.0
      %628 = vmatprep.subr.mxu0 0.0
      %629 = vmatpush1.msra.mxu0 0.0
      %630 = vmatprep.subr.mxu0 0.0
      %631 = vmatpush1.msra.mxu0 0.0
      %632 = vmatprep.subr.mxu0 0.0
      %633 = vmatpush1.msra.mxu0 0.0
      %634 = vmatprep.subr.mxu0 0.0
      %635 = vmatpush1.msra.mxu0 0.0
      %636 = vmatprep.subr.mxu0 0.0
      %637 = vmatpush1.msra.mxu0 0.0
      %638 = vmatprep.subr.mxu0 0.0
      %639 = vmatpush1.msra.mxu0 0.0
      %640 = vmatprep.subr.mxu0 0.0
      %641 = vmatpush1.msra.mxu0 0.0
      %642 = vmatprep.subr.mxu0 0.0
      %643 = vmatpush1.msra.mxu0 0.0
      %644 = vmatprep.subr.mxu0 0.0
      %645 = vmatpush1.msra.mxu0 0.0
      %646 = vmatprep.subr.mxu0 0.0
      %647 = vmatpush1.msra.mxu0 0.0
      %648 = vmatprep.subr.mxu0 0.0
      %649 = vmatpush1.msra.mxu0 0.0
      %650 = vmatprep.subr.mxu0 0.0
      %651 = vmatpush1.msra.mxu0 0.0
      %652 = vmatprep.subr.mxu0 0.0
      %653 = vmatpush1.msra.mxu0 0.0
      %654 = vmatprep.subr.mxu0 0.0
      %655 = vmatpush1.msra.mxu0 0.0
      %656 = vmatprep.subr.mxu0 0.0
      %657 = vmatpush1.msra.mxu0 0.0
      %658 = vmatprep.subr.mxu0 0.0
      %659 = vmatpush1.msra.mxu0 0.0
      %660 = vmatprep.subr.mxu0 0.0
      %661 = vmatpush1.msra.mxu0 0.0
      %662 = vmatprep.subr.mxu0 0.0
      %663 = vmatpush1.msra.mxu0 0.0
      %664 = vmatprep.mubr.f32.mxu0 0.0
      %665 = vmatmul.mubr.f32.gmra.mrb[0].mxu0 %v593
      %v666 = vpop.f32.mrb[0].mxu0
      %v667 = vadd.f32 0.0, %v666
      %v668 = vpop.f32.mrb[0].mxu0
      %669 = vmatprep.mubr.f32.mxu0 0.0
      %670 = vmatmul.mubr.f32.gmra.mrb[0].mxu0 %v596
      %v671 = vpop.f32.mrb[0].mxu0
      %v672 = vadd.f32 0.0, %v671
      %v673 = vpop.f32.mrb[0].mxu0
      %674 = vdwg.mxu0
      %v675 = vxor.u32 %v667, 2147483648
      %v676 = vxor.u32 %v672, 2147483648
      %v677 = vmul.f32 %v675, 1.442695
      %v678 = vpow.pop %v677
      %v679 = vmul.f32 %v676, 1.442695
      %v680 = vpow.pop %v679
      %v681 = vadd.f32 %v678, 1.0
      %v682 = vadd.f32 %v680, 1.0
      %v683 = vrcp.pop %v681
      %v684 = vmul.f32 1.0, %v683
      %v685 = vrcp.pop %v682
      %v686 = vmul.f32 1.0, %v685
      %vm687 = vcmask 64512
      %688 = vst.msk [vmem:[#allocation4] sm:$0xff] %vm687, %v684
      %689 = vst.msk [vmem:[#allocation4 + $0x8] sm:$0xff] %vm687, %v686
      %v690 = vld [vmem:[#allocation3] sm:$0xff]
      %v691 = vld [vmem:[#allocation3 + $0x8] sm:$0xff]
      %v692 = vld [vmem:[#allocation4] sm:$0xff]
      %v693 = vld [vmem:[#allocation4 + $0x8] sm:$0xff]
      %v694 = vld [vmem:[%s6] sm:$0xff]
      %v695 = vld [vmem:[%s6 + $0x8] sm:$0xff]
      %v697 = vsel %vm415, %v690, 0
      %v700 = vsel %vm415, %v691, 0
      %702 = vmatprep.subr.mxu0 0.0
      %703 = vmatpush1.msra.mxu0 %v694
      %704 = vmatprep.subr.mxu0 0.0
      %705 = vmatpush1.msra.mxu0 %v695
      %706 = vmatprep.subr.mxu0 0.0
      %707 = vmatpush1.msra.mxu0 0.0
      %708 = vmatprep.subr.mxu0 0.0
      %709 = vmatpush1.msra.mxu0 0.0
      %710 = vmatprep.subr.mxu0 0.0
      %711 = vmatpush1.msra.mxu0 0.0
      %712 = vmatprep.subr.mxu0 0.0
      %713 = vmatpush1.msra.mxu0 0.0
      %714 = vmatprep.subr.mxu0 0.0
      %715 = vmatpush1.msra.mxu0 0.0
      %716 = vmatprep.subr.mxu0 0.0
      %717 = vmatpush1.msra.mxu0 0.0
      %718 = vmatprep.subr.mxu0 0.0
      %719 = vmatpush1.msra.mxu0 0.0
      %720 = vmatprep.subr.mxu0 0.0
      %721 = vmatpush1.msra.mxu0 0.0
      %722 = vmatprep.subr.mxu0 0.0
      %723 = vmatpush1.msra.mxu0 0.0
      %724 = vmatprep.subr.mxu0 0.0
      %725 = vmatpush1.msra.mxu0 0.0
      %726 = vmatprep.subr.mxu0 0.0
      %727 = vmatpush1.msra.mxu0 0.0
      %728 = vmatprep.subr.mxu0 0.0
      %729 = vmatpush1.msra.mxu0 0.0
      %730 = vmatprep.subr.mxu0 0.0
      %731 = vmatpush1.msra.mxu0 0.0
      %732 = vmatprep.subr.mxu0 0.0
      %733 = vmatpush1.msra.mxu0 0.0
      %734 = vmatprep.subr.mxu0 0.0
      %735 = vmatpush1.msra.mxu0 0.0
      %736 = vmatprep.subr.mxu0 0.0
      %737 = vmatpush1.msra.mxu0 0.0
      %738 = vmatprep.subr.mxu0 0.0
      %739 = vmatpush1.msra.mxu0 0.0
      %740 = vmatprep.subr.mxu0 0.0
      %741 = vmatpush1.msra.mxu0 0.0
      %742 = vmatprep.subr.mxu0 0.0
      %743 = vmatpush1.msra.mxu0 0.0
      %744 = vmatprep.subr.mxu0 0.0
      %745 = vmatpush1.msra.mxu0 0.0
      %746 = vmatprep.subr.mxu0 0.0
      %747 = vmatpush1.msra.mxu0 0.0
      %748 = vmatprep.subr.mxu0 0.0
      %749 = vmatpush1.msra.mxu0 0.0
      %750 = vmatprep.subr.mxu0 0.0
      %751 = vmatpush1.msra.mxu0 0.0
      %752 = vmatprep.subr.mxu0 0.0
      %753 = vmatpush1.msra.mxu0 0.0
      %754 = vmatprep.subr.mxu0 0.0
      %755 = vmatpush1.msra.mxu0 0.0
      %756 = vmatprep.subr.mxu0 0.0
      %757 = vmatpush1.msra.mxu0 0.0
      %758 = vmatprep.subr.mxu0 0.0
      %759 = vmatpush1.msra.mxu0 0.0
      %760 = vmatprep.subr.mxu0 0.0
      %761 = vmatpush1.msra.mxu0 0.0
      %762 = vmatprep.subr.mxu0 0.0
      %763 = vmatpush1.msra.mxu0 0.0
      %764 = vmatprep.subr.mxu0 0.0
      %765 = vmatpush1.msra.mxu0 0.0
      %766 = vmatprep.mubr.f32.mxu0 0.0
      %767 = vmatmul.mubr.f32.gmra.mrb[0].mxu0 %v697
      %v768 = vpop.f32.mrb[0].mxu0
      %v769 = vadd.f32 0.0, %v768
      %v770 = vpop.f32.mrb[0].mxu0
      %771 = vmatprep.mubr.f32.mxu0 0.0
      %772 = vmatmul.mubr.f32.gmra.mrb[0].mxu0 %v700
      %v773 = vpop.f32.mrb[0].mxu0
      %v774 = vadd.f32 0.0, %v773
      %v775 = vpop.f32.mrb[0].mxu0
      %776 = vdwg.mxu0
      %v777 = vld [vmem:[%s7] sm:$0xff]
      %v779 = vsel %vm687, %v692, 0
      %v782 = vsel %vm687, %v693, 0
      %784 = vmatprep.subr.mxu0 0.0
      %785 = vmatpush1.msra.mxu0 %v777
      %786 = vmatprep.subr.mxu0 0.0
      %787 = vmatpush1.msra.mxu0 0.0
      %788 = vmatprep.subr.mxu0 0.0
      %789 = vmatpush1.msra.mxu0 0.0
      %790 = vmatprep.subr.mxu0 0.0
      %791 = vmatpush1.msra.mxu0 0.0
      %792 = vmatprep.subr.mxu0 0.0
      %793 = vmatpush1.msra.mxu0 0.0
      %794 = vmatprep.subr.mxu0 0.0
      %795 = vmatpush1.msra.mxu0 0.0
      %796 = vmatprep.subr.mxu0 0.0
      %797 = vmatpush1.msra.mxu0 0.0
      %798 = vmatprep.subr.mxu0 0.0
      %799 = vmatpush1.msra.mxu0 0.0
      %800 = vmatprep.subr.mxu0 0.0
      %801 = vmatpush1.msra.mxu0 0.0
      %802 = vmatprep.subr.mxu0 0.0
      %803 = vmatpush1.msra.mxu0 0.0
      %804 = vmatprep.subr.mxu0 0.0
      %805 = vmatpush1.msra.mxu0 0.0
      %806 = vmatprep.subr.mxu0 0.0
      %807 = vmatpush1.msra.mxu0 0.0
      %808 = vmatprep.subr.mxu0 0.0
      %809 = vmatpush1.msra.mxu0 0.0
      %810 = vmatprep.subr.mxu0 0.0
      %811 = vmatpush1.msra.mxu0 0.0
      %812 = vmatprep.subr.mxu0 0.0
      %813 = vmatpush1.msra.mxu0 0.0
      %814 = vmatprep.subr.mxu0 0.0
      %815 = vmatpush1.msra.mxu0 0.0
      %816 = vmatprep.subr.mxu0 0.0
      %817 = vmatpush1.msra.mxu0 0.0
      %818 = vmatprep.subr.mxu0 0.0
      %819 = vmatpush1.msra.mxu0 0.0
      %820 = vmatprep.subr.mxu0 0.0
      %821 = vmatpush1.msra.mxu0 0.0
      %822 = vmatprep.subr.mxu0 0.0
      %823 = vmatpush1.msra.mxu0 0.0
      %824 = vmatprep.subr.mxu0 0.0
      %825 = vmatpush1.msra.mxu0 0.0
      %826 = vmatprep.subr.mxu0 0.0
      %827 = vmatpush1.msra.mxu0 0.0
      %828 = vmatprep.subr.mxu0 0.0
      %829 = vmatpush1.msra.mxu0 0.0
      %830 = vmatprep.subr.mxu0 0.0
      %831 = vmatpush1.msra.mxu0 0.0
      %832 = vmatprep.subr.mxu0 0.0
      %833 = vmatpush1.msra.mxu0 0.0
      %834 = vmatprep.subr.mxu0 0.0
      %835 = vmatpush1.msra.mxu0 0.0
      %836 = vmatprep.subr.mxu0 0.0
      %837 = vmatpush1.msra.mxu0 0.0
      %838 = vmatprep.subr.mxu0 0.0
      %839 = vmatpush1.msra.mxu0 0.0
      %840 = vmatprep.subr.mxu0 0.0
      %841 = vmatpush1.msra.mxu0 0.0
      %842 = vmatprep.subr.mxu0 0.0
      %843 = vmatpush1.msra.mxu0 0.0
      %844 = vmatprep.subr.mxu0 0.0
      %845 = vmatpush1.msra.mxu0 0.0
      %846 = vmatprep.subr.mxu0 0.0
      %847 = vmatpush1.msra.mxu0 0.0
      %848 = vmatprep.mubr.f32.mxu0 0.0
      %849 = vmatmul.mubr.f32.gmra.mrb[0].mxu0 %v779
      %v850 = vpop.f32.mrb[0].mxu0
      %v851 = vadd.f32 0.0, %v850
      %v852 = vpop.f32.mrb[0].mxu0
      %853 = vmatprep.mubr.f32.mxu0 0.0
      %854 = vmatmul.mubr.f32.gmra.mrb[0].mxu0 %v782
      %v855 = vpop.f32.mrb[0].mxu0
      %v856 = vadd.f32 0.0, %v855
      %v857 = vpop.f32.mrb[0].mxu0
      %858 = vdwg.mxu0
      %v859 = vmul.f32 %v769, %v851
      %v860 = vmul.f32 %v774, %v856
      %v861 = vmul.f32 %v306, %v859
      %v862 = vmul.f32 %v307, %v860
      %863 = vst [vmem:[%s305] sm:$0xff] %v861
      %864 = vst [vmem:[%s305 + $0x8] sm:$0xff] %v862
      %p865 = scmp.lt.s32.totalorder %s19, 1
      %s866 = scalar_select %p865, %s19, 1
      %s867 = smul.addr %s866, 2
      %s868 = smul.addr %s867, 8
      %s869 = scalar_lea.vmem %s8, %s868
      // Predicated region
      $region53: #{dtcf_attention.1} parent=51 // pred_check
        %p870 = pneg %p210
      $region54: #{dtcf_attention.1} parent=51 // pred_check_branch
        %872 = sbr.rel (%p870) target = $region56
      $region55: #{dtcf_attention.1} parent=51 // pred_region
        _
      $region56: #{dtcf_attention.1} parent=51 // pred_fallthru
        _
    $region52: #{dtcf_attention.1} parent=5 // pred_fallthru
      _
    %p873 = scmp.le.s32.totalorder 2, %s14
    // Predicated region
    $region57: #{dtcf_attention.1} parent=5 // pred_check
      %p874 = pneg %p873
    $region58: #{dtcf_attention.1} parent=5 // pred_check_branch
      %876 = sbr.rel (%p874) target = $region60
    $region59: #{dtcf_attention.1} parent=5 // pred_region
      %s877 = ssub.s32 %s14, 2
      // Predicated region
      $region61: #{dtcf_attention.1} parent=59 // pred_check
        %p878 = pneg %p216
      $region62: #{dtcf_attention.1} parent=59 // pred_check_branch
        %880 = sbr.rel (%p878) target = $region64
      $region63: #{dtcf_attention.1} parent=59 // pred_region
        %p881 = scmp.lt.s32.totalorder %s20, 1
        %s882 = scalar_select %p881, %s20, 1
        %s883 = smul.addr %s882, 2
        %s884 = smul.addr %s883, 8
        %s885 = scalar_lea.vmem %s8, %s884
      $region64: #{dtcf_attention.1} parent=59 // pred_fallthru
        _
    $region60: #{dtcf_attention.1} parent=5 // pred_fallthru
      _
  $region6: #{dtcf_attention.1} parent=0 // loop_footer
    %s18 = sadd.s32 1, %s14
  $region7: #{dtcf_attention.1} parent=0 // loop_footer_branch
    %13 = sbr.rel target = $region3
  $region8: #{dtcf_attention.1} parent=0 // loop_exit
    _

</llo_original>
